<compile_context>
chip_gen: v7x
topology: tpu7x:2x2x1
jax: 0.10.0
libtpu: 0.0.40
codegen_flags: <defaults>
</compile_context>

<pallas_src>
import math

import jax
import jax.numpy as jnp
from jax.experimental import pallas as pl
from jax.experimental.pallas import tpu as pltpu


def _round_up(n, m):
    return ((n + m - 1) // m) * m


def _small_ann_kernel(x_ref, w1_ref, b1_ref, s_ref, b2_ref, o_ref):
    # fc1 on the MXU with lane-dense K: (tile_q, P*F) @ (P*F, P*H), f32 acc.
    z = jnp.dot(x_ref[...], w1_ref[...], preferred_element_type=jnp.float32)
    z = jnp.maximum(z + b1_ref[...], 0.0)                       # bias + ReLU (VPU)
    # fc3 as a per-group selector matmul: (tile_q, P*H) @ (P*H, P) -> (tile_q, P);
    # column g of a row is the scalar output of original sample P*row + g.
    out = jnp.dot(z, s_ref[...], preferred_element_type=jnp.float32) + b2_ref[0, 0]
    o_ref[...] = out.astype(o_ref.dtype)


def small_ann_forward(x, fc1_w, fc1_b, fc3_w, fc3_b, *, tile_q=4096):
    """Fused two-layer MLP forward pass in a single Pallas kernel.

    x:      (B, F) float32
    fc1_w:  (H, F) float32  (PyTorch layout),  fc1_b: (H,)
    fc3_w:  (1, H) float32  (PyTorch layout),  fc3_b: (1,)
    returns (B, 1) float32
    """
    x = x.astype(jnp.float32)
    B, F = x.shape
    H = fc1_w.shape[0]

    # Pack P consecutive samples per 128-lane row so input DMA / loads / MXU
    # are lane-dense (F=32 -> P=4, packed width 128).
    P = max(1, 128 // F)
    Bp = _round_up(B, P)
    if Bp != B:
        # Only triggers when B % P != 0 (rare for training batches).
        # TODO(synk): handle the <P tail rows in plain jnp to avoid this copy.
        x = jnp.pad(x, ((0, Bp - B), (0, 0)))
    Bq = Bp // P
    xp = x.reshape(Bq, P * F)            # row-major contiguous -> free reshape
    PF, PH = P * F, P * H

    # Packed parameters (tiny; built once per call).
    w1 = fc1_w.T.astype(jnp.float32)                                    # (F, H)
    w1_bd = jnp.kron(jnp.eye(P, dtype=jnp.float32), w1)                 # (P*F, P*H) block-diag
    b1_t = jnp.tile(fc1_b.reshape(1, H).astype(jnp.float32), (1, P))    # (1, P*H)
    sel = jnp.kron(jnp.eye(P, dtype=jnp.float32),
                   fc3_w.reshape(H, 1).astype(jnp.float32))             # (P*H, P)
    b2 = fc3_b.reshape(1, 1).astype(jnp.float32)                        # SMEM scalar

    # Tile sizing: cap so double-buffered in+out streams stay under ~8 MiB
    # (safe inside v5e's 16 MiB scoped-VMEM default; v6e/v7x have 32 MiB),
    # keep >=4 grid steps for megacore on v7x when B is large, and a multiple
    # of 8 sublanes for f32.
    tile_q = min(int(tile_q), 4096)
    tile_q = max(8, min(tile_q, _round_up(pl.cdiv(Bq, 4), 8)))
    grid = (pl.cdiv(Bq, tile_q),)        # ragged last block handled by Pallas

    cost = pl.CostEstimate(
        flops=2 * Bq * PF * PH + 2 * Bq * PH * P + 2 * Bq * PH,
        transcendentals=0,
        bytes_accessed=(Bq * PF + Bq * P + PF * PH + PH + PH * P + 1) * 4,
    )

    out = pl.pallas_call(
        _small_ann_kernel,
        out_shape=jax.ShapeDtypeStruct((Bq, P), jnp.float32),
        grid=grid,
        in_specs=[
            # x streams tile-by-tile (double-buffered, lane-dense rows).
            pl.BlockSpec((tile_q, PF), lambda i: (i, 0)),
            # Weights / biases stay resident across all grid steps.
            pl.BlockSpec((PF, PH), lambda i: (0, 0)),
            pl.BlockSpec((1, PH), lambda i: (0, 0)),
            pl.BlockSpec((PH, P), lambda i: (0, 0)),
            # b2 is a single scalar: SMEM, not a padded VMEM tile.
            pl.BlockSpec(memory_space=pltpu.MemorySpace.SMEM),
        ],
        out_specs=pl.BlockSpec((tile_q, P), lambda i: (i, 0)),
        compiler_params=pltpu.CompilerParams(
            # Batch tiles are independent -> shard across TensorCores on v7x.
            dimension_semantics=("parallel",),
        ),
        cost_estimate=cost,
    )(xp, w1_bd, b1_t, sel, b2)

    # (Bq, P) row-major == batch order; free reshape, then drop the P-padding rows.
    return out.reshape(Bp, 1)[:B]


def xavier_uniform(key, shape):
    # PyTorch xavier_uniform_ on an (out, in) weight: bound = sqrt(6/(in+out))
    fan_out, fan_in = shape
    bound = math.sqrt(6.0 / (fan_in + fan_out))
    return jax.random.uniform(key, shape, jnp.float32, -bound, bound)


if __name__ == "__main__":
    key = jax.random.PRNGKey(0)
    k_x1, k_x2, k_x3, k_w1, k_w2 = jax.random.split(key, 5)

    n_features = 32
    H = 5

    # Parameters in PyTorch layout, matching the module's __init__ semantics.
    w1_pt = xavier_uniform(k_w1, (H, n_features))   # fc1.weight (5, 32)
    b1_pt = jnp.zeros((H,), jnp.float32)            # fc1.bias
    w2_pt = xavier_uniform(k_w2, (1, H))            # fc3.weight (1, 5)
    b2_pt = jnp.zeros((1,), jnp.float32)            # fc3.bias

    def reference(x):
        return jnp.maximum(x @ w1_pt.T + b1_pt, 0.0) @ w2_pt.T + b2_pt

    # Case 1: tiny batch (single packed tile).
    x1 = jax.random.normal(k_x1, (8, n_features), jnp.float32)
    o1 = jax.block_until_ready(small_ann_forward(x1, w1_pt, b1_pt, w2_pt, b2_pt))
    assert o1.shape == (8, 1)
    assert jnp.allclose(o1, reference(x1), atol=1e-4, rtol=1e-4)

    # Case 2: batch not a multiple of the tile -> ragged last grid block.
    x2 = jax.random.normal(k_x2, (300, n_features), jnp.float32)
    o2 = jax.block_until_ready(
        small_ann_forward(x2, w1_pt, b1_pt, w2_pt, b2_pt, tile_q=16)
    )
    assert o2.shape == (300, 1)
    assert jnp.allclose(o2, reference(x2), atol=1e-4, rtol=1e-4)

    # Case 3: batch not a multiple of the packing factor P=4.
    x3 = jax.random.normal(k_x3, (37, n_features), jnp.float32)
    o3 = jax.block_until_ready(small_ann_forward(x3, w1_pt, b1_pt, w2_pt, b2_pt))
    assert o3.shape == (37, 1)
    assert jnp.allclose(o3, reference(x3), atol=1e-4, rtol=1e-4)

    print("KERNEL_OK")
</pallas_src>

<mosaic_0001>
module attributes {stable_mosaic.version = 11 : i64} {
  func.func @_small_ann_kernel(%arg0: i32, %arg1: memref<8x128xf32, #tpu.memory_space<vmem>>, %arg2: memref<128x20xf32, #tpu.memory_space<vmem>>, %arg3: memref<1x20xf32, #tpu.memory_space<vmem>>, %arg4: memref<20x4xf32, #tpu.memory_space<vmem>>, %arg5: memref<1x1xf32, #tpu.memory_space<smem>>, %arg6: memref<8x4xf32, #tpu.memory_space<vmem>>) attributes {dimension_semantics = [#tpu.dimension_semantics<parallel>], iteration_bounds = array<i64: 1>, scalar_prefetch = 0 : i64, scratch_operands = 0 : i64, tpu.core_type = #tpu.core_type<tc>, window_params = [{transform_indices = @transform_0, window_bounds = array<i64: 8, 128>}, {pipeline_mode = #tpu.pipeline_mode<synchronous>, transform_indices = @transform_1, window_bounds = array<i64: 128, 20>}, {pipeline_mode = #tpu.pipeline_mode<synchronous>, transform_indices = @transform_2, window_bounds = array<i64: 1, 20>}, {pipeline_mode = #tpu.pipeline_mode<synchronous>, transform_indices = @transform_3, window_bounds = array<i64: 20, 4>}, {transform_indices = @transform_4, window_bounds = array<i64: 1, 1>}, {transform_indices = @transform_5, window_bounds = array<i64: 8, 4>}]} {
    %c0 = arith.constant 0 : index
    %c0_0 = arith.constant 0 : index
    %0 = vector.load %arg1[%c0, %c0_0] : memref<8x128xf32, #tpu.memory_space<vmem>>, vector<8x128xf32>
    %c0_1 = arith.constant 0 : index
    %c0_2 = arith.constant 0 : index
    %1 = vector.load %arg2[%c0_1, %c0_2] : memref<128x20xf32, #tpu.memory_space<vmem>>, vector<128x20xf32>
    %cst = arith.constant dense<0.000000e+00> : vector<8x20xf32>
    %2 = tpu.matmul %0, %1, %cst {dimension_numbers = #tpu.dot_dimension_numbers<[1], [0], [0], [1], [0, 0, 1, 1], [], []>} : vector<8x128xf32>, vector<128x20xf32>, vector<8x20xf32> -> vector<8x20xf32>
    %c0_3 = arith.constant 0 : index
    %c0_4 = arith.constant 0 : index
    %3 = vector.load %arg3[%c0_3, %c0_4] : memref<1x20xf32, #tpu.memory_space<vmem>>, vector<1x20xf32>
    %4 = vector.broadcast %3 : vector<1x20xf32> to vector<8x20xf32>
    %5 = arith.addf %2, %4 : vector<8x20xf32>
    %cst_5 = arith.constant 0.000000e+00 : f32
    %6 = vector.broadcast %cst_5 : f32 to vector<8x20xf32>
    %7 = arith.maximumf %5, %6 : vector<8x20xf32>
    %c0_6 = arith.constant 0 : index
    %c0_7 = arith.constant 0 : index
    %8 = vector.load %arg4[%c0_6, %c0_7] : memref<20x4xf32, #tpu.memory_space<vmem>>, vector<20x4xf32>
    %cst_8 = arith.constant dense<0.000000e+00> : vector<8x4xf32>
    %9 = tpu.matmul %7, %8, %cst_8 {dimension_numbers = #tpu.dot_dimension_numbers<[1], [0], [0], [1], [0, 0, 1, 1], [], []>} : vector<8x20xf32>, vector<20x4xf32>, vector<8x4xf32> -> vector<8x4xf32>
    %c0_9 = arith.constant 0 : index
    %c0_10 = arith.constant 0 : index
    %10 = memref.load %arg5[%c0_9, %c0_10] : memref<1x1xf32, #tpu.memory_space<smem>>
    %11 = vector.broadcast %10 : f32 to vector<8x4xf32>
    %12 = arith.addf %9, %11 : vector<8x4xf32>
    %c0_11 = arith.constant 0 : index
    %c0_12 = arith.constant 0 : index
    %13 = vector.load %arg6[%c0_11, %c0_12] : memref<8x4xf32, #tpu.memory_space<vmem>>, vector<8x4xf32>
    tpu.vector_store %arg6[%c0_11, %c0_12], %12 {strides = array<i32>} : memref<8x4xf32, #tpu.memory_space<vmem>>, vector<8x4xf32>,
    return
  }
  func.func @transform_0(%arg0: i32) -> (i32, i32) {
    %c0_i32 = arith.constant 0 : i32
    %c0_i32_0 = arith.constant 0 : i32
    return %arg0, %c0_i32 : i32, i32
  }
  func.func @transform_1(%arg0: i32) -> (i32, i32) {
    %c0_i32 = arith.constant 0 : i32
    %c0_i32_0 = arith.constant 0 : i32
    %c0_i32_1 = arith.constant 0 : i32
    return %c0_i32, %c0_i32_0 : i32, i32
  }
  func.func @transform_2(%arg0: i32) -> (i32, i32) {
    %c0_i32 = arith.constant 0 : i32
    %c0_i32_0 = arith.constant 0 : i32
    %c0_i32_1 = arith.constant 0 : i32
    return %c0_i32, %c0_i32_0 : i32, i32
  }
  func.func @transform_3(%arg0: i32) -> (i32, i32) {
    %c0_i32 = arith.constant 0 : i32
    %c0_i32_0 = arith.constant 0 : i32
    %c0_i32_1 = arith.constant 0 : i32
    return %c0_i32, %c0_i32_0 : i32, i32
  }
  func.func @transform_4(%arg0: i32) -> (i32, i32) {
    %c0_i32 = arith.constant 0 : i32
    %c0_i32_0 = arith.constant 0 : i32
    %c0_i32_1 = arith.constant 0 : i32
    return %c0_i32, %c0_i32_0 : i32, i32
  }
  func.func @transform_5(%arg0: i32) -> (i32, i32) {
    %c0_i32 = arith.constant 0 : i32
    %c0_i32_0 = arith.constant 0 : i32
    return %arg0, %c0_i32 : i32, i32
  }
}

</mosaic_0001>

<llo_original>
// kernel: tpu_custom_call.1
$region0: #{tpu_custom_call.1}
  #allocation0 [shape = 'u32[]', space=smem, size = 0x4, offset = 0x4, fixed_abs, tag = 'smem constant byte address 0x4 - core index']
  #allocation1 [shape = 'u32[144,128]{1,0:T(1,128)}', space=vmem, size = 0x12000, scoped, tag = 'internal scratch']
  #allocation2 [shape = 'f32[1,1]{1,0:T(1,128)S(6)}', space=smem, size = 0x200, scoped, tag = 'scoped memory for tpu_custom_call.1']
  %s0 = inlined_call_operand.vmem [shape: f32[2,128], index: 0, kind: input, shape index: {}]
  %s1 = inlined_call_operand.vmem [shape: f32[128,20], index: 1, kind: input, shape index: {}]
  %s2 = inlined_call_operand.vmem [shape: f32[1,20], index: 2, kind: input, shape index: {}]
  %s3 = inlined_call_operand.vmem [shape: f32[20,4], index: 3, kind: input, shape index: {}]
  %s4 = inlined_call_operand.<no memory space> [shape: f32[1,1], index: 4, kind: input, shape index: {}]
  %s5 = inlined_call_operand.hbm [shape: f32[2,4], index: 5, kind: output, shape index: {}]
  %s6 = sld [smem:[#allocation0]]
  $region30: #{tpu_custom_call.1} parent=0
    _
  %s8 = ssub.s32 1, %s6
  %s9 = scalar_select 0, %s8, %s6
  %10 = sst [smem:[#allocation2]] %s4
  $region1: #{tpu_custom_call.1} parent=0
    #allocation3 [shape = 'u8[4096]{0}', space=vmem, size = 0x1000, scoped, tag = 'output window, operand 0, single buffered']
    #allocation4 [shape = 's32[1]{0}', space=sflag, size = 0x4, scoped, tag = 'scoped memory for tpu_custom_call.1']
    %11 = vsyncpa [#allocation4], 0
    // Predicated region
    $region2: #{tpu_custom_call.1} parent=1 // pred_check
      _
    $region3: #{tpu_custom_call.1} parent=1 // pred_check_branch
      %13 = sbr.rel (0) target = $region5
    $region4: #{tpu_custom_call.1} parent=1 // pred_region
      _
    $region5: #{tpu_custom_call.1} parent=1 // pred_fallthru
      _
    // Predicated region
    $region6: #{tpu_custom_call.1} parent=1 // pred_check
      _
    $region7: #{tpu_custom_call.1} parent=1 // pred_check_branch
      %15 = sbr.rel (0) target = $region9
    $region8: #{tpu_custom_call.1} parent=1 // pred_region
      _
    $region9: #{tpu_custom_call.1} parent=1 // pred_fallthru
      _
    // Predicated region
    $region10: #{tpu_custom_call.1} parent=1 // pred_check
      _
    $region11: #{tpu_custom_call.1} parent=1 // pred_check_branch
      %17 = sbr.rel (0) target = $region13
    $region12: #{tpu_custom_call.1} parent=1 // pred_region
      _
    $region13: #{tpu_custom_call.1} parent=1 // pred_fallthru
      _
    // Predicated region
    $region14: #{tpu_custom_call.1} parent=1 // pred_check
      _
    $region15: #{tpu_custom_call.1} parent=1 // pred_check_branch
      %19 = sbr.rel (0) target = $region17
    $region16: #{tpu_custom_call.1} parent=1 // pred_region
      _
    $region17: #{tpu_custom_call.1} parent=1 // pred_fallthru
      _
    // Predicated region
    $region18: #{tpu_custom_call.1} parent=1 // pred_check
      _
    $region19: #{tpu_custom_call.1} parent=1 // pred_check_branch
      %21 = sbr.rel (0) target = $region21
    $region20: #{tpu_custom_call.1} parent=1 // pred_region
      _
    $region21: #{tpu_custom_call.1} parent=1 // pred_fallthru
      _
    %v22 = vld [vmem:[%s0] sm:$0xff]
    %v23 = vld [vmem:[%s1] sm:$0xff]
    %v24 = vld [vmem:[%s1 + $0x8] sm:$0xff]
    %v25 = vld [vmem:[%s1 + $0x10] sm:$0xff]
    %v26 = vld [vmem:[%s1 + $0x18] sm:$0xff]
    %v27 = vld [vmem:[%s1 + $0x20] sm:$0xff]
    %v28 = vld [vmem:[%s1 + $0x28] sm:$0xff]
    %v29 = vld [vmem:[%s1 + $0x30] sm:$0xff]
    %v30 = vld [vmem:[%s1 + $0x38] sm:$0xff]
    %v31 = vld [vmem:[%s1 + $0x40] sm:$0xff]
    %v32 = vld [vmem:[%s1 + $0x48] sm:$0xff]
    %v33 = vld [vmem:[%s1 + $0x50] sm:$0xff]
    %v34 = vld [vmem:[%s1 + $0x58] sm:$0xff]
    %v35 = vld [vmem:[%s1 + $0x60] sm:$0xff]
    %v36 = vld [vmem:[%s1 + $0x68] sm:$0xff]
    %v37 = vld [vmem:[%s1 + $0x70] sm:$0xff]
    %v38 = vld [vmem:[%s1 + $0x78] sm:$0xff]
    %v39 = vld [vmem:[%s2] sm:$0x1]
    %v41 = vlaneseq
    %v42 = vshrl.u32 %v41, 7
    %v43 = vsub.s32 0, %v42
    %v44 = vrot.slane %v39, %v43
    %46 = vmatprep.subr.mxu0 0.0
    %47 = vmatpush1.msra.mxu0 %v23
    %48 = vmatprep.subr.mxu0 0.0
    %49 = vmatpush1.msra.mxu0 %v24
    %50 = vmatprep.subr.mxu0 0.0
    %51 = vmatpush1.msra.mxu0 %v25
    %52 = vmatprep.subr.mxu0 0.0
    %53 = vmatpush1.msra.mxu0 %v26
    %54 = vmatprep.subr.mxu0 0.0
    %55 = vmatpush1.msra.mxu0 %v27
    %56 = vmatprep.subr.mxu0 0.0
    %57 = vmatpush1.msra.mxu0 %v28
    %58 = vmatprep.subr.mxu0 0.0
    %59 = vmatpush1.msra.mxu0 %v29
    %60 = vmatprep.subr.mxu0 0.0
    %61 = vmatpush1.msra.mxu0 %v30
    %62 = vmatprep.subr.mxu0 0.0
    %63 = vmatpush1.msra.mxu0 %v31
    %64 = vmatprep.subr.mxu0 0.0
    %65 = vmatpush1.msra.mxu0 %v32
    %66 = vmatprep.subr.mxu0 0.0
    %67 = vmatpush1.msra.mxu0 %v33
    %68 = vmatprep.subr.mxu0 0.0
    %69 = vmatpush1.msra.mxu0 %v34
    %70 = vmatprep.subr.mxu0 0.0
    %71 = vmatpush1.msra.mxu0 %v35
    %72 = vmatprep.subr.mxu0 0.0
    %73 = vmatpush1.msra.mxu0 %v36
    %74 = vmatprep.subr.mxu0 0.0
    %75 = vmatpush1.msra.mxu0 %v37
    %76 = vmatprep.subr.mxu0 0.0
    %77 = vmatpush1.msra.mxu0 %v38
    %78 = vmatprep.subr.mxu0 0.0
    %79 = vmatpush1.msra.mxu0 0.0
    %80 = vmatprep.subr.mxu0 0.0
    %81 = vmatpush1.msra.mxu0 0.0
    %82 = vmatprep.subr.mxu0 0.0
    %83 = vmatpush1.msra.mxu0 0.0
    %84 = vmatprep.subr.mxu0 0.0
    %85 = vmatpush1.msra.mxu0 0.0
    %86 = vmatprep.subr.mxu0 0.0
    %87 = vmatpush1.msra.mxu0 0.0
    %88 = vmatprep.subr.mxu0 0.0
    %89 = vmatpush1.msra.mxu0 0.0
    %90 = vmatprep.subr.mxu0 0.0
    %91 = vmatpush1.msra.mxu0 0.0
    %92 = vmatprep.subr.mxu0 0.0
    %93 = vmatpush1.msra.mxu0 0.0
    %94 = vmatprep.subr.mxu0 0.0
    %95 = vmatpush1.msra.mxu0 0.0
    %96 = vmatprep.subr.mxu0 0.0
    %97 = vmatpush1.msra.mxu0 0.0
    %98 = vmatprep.subr.mxu0 0.0
    %99 = vmatpush1.msra.mxu0 0.0
    %100 = vmatprep.subr.mxu0 0.0
    %101 = vmatpush1.msra.mxu0 0.0
    %102 = vmatprep.subr.mxu0 0.0
    %103 = vmatpush1.msra.mxu0 0.0
    %104 = vmatprep.subr.mxu0 0.0
    %105 = vmatpush1.msra.mxu0 0.0
    %106 = vmatprep.subr.mxu0 0.0
    %107 = vmatpush1.msra.mxu0 0.0
    %108 = vmatprep.subr.mxu0 0.0
    %109 = vmatpush1.msra.mxu0 0.0
    %110 = vmatprep.mubr.f32.mxu0 0.0
    %111 = vmatmul.mubr.f32.gmra.mrb[0].mxu0 %v22
    %v112 = vpop.f32.mrb[0].mxu0
    %v113 = vadd.f32 %v44, %v112
    %v114 = vpop.f32.mrb[0].mxu0
    %115 = vdwg.mxu0
    %v116 = vmax.f32 %v113, 0.0
    %v117 = vld [vmem:[%s3] sm:$0xff]
    %v118 = vld [vmem:[%s3 + $0x8] sm:$0xff]
    %v119 = vld [vmem:[%s3 + $0x10] sm:$0xf]
    %s120 = sld [smem:[#allocation2]]
    %v121 = vstv %s120
    %vm122 = vcmask 162816
    %v124 = vsel %vm122, %v116, 0
    %vm126 = vcmask 1043456
    %v128 = vsel %vm126, %v119, 0
    %130 = vmatprep.subr.mxu0 0.0
    %131 = vmatpush1.msra.mxu0 %v117
    %132 = vmatprep.subr.mxu0 0.0
    %133 = vmatpush1.msra.mxu0 %v118
    %134 = vmatprep.subr.mxu0 0.0
    %135 = vmatpush1.msra.mxu0 %v128
    %136 = vmatprep.subr.mxu0 0.0
    %137 = vmatpush1.msra.mxu0 0.0
    %138 = vmatprep.subr.mxu0 0.0
    %139 = vmatpush1.msra.mxu0 0.0
    %140 = vmatprep.subr.mxu0 0.0
    %141 = vmatpush1.msra.mxu0 0.0
    %142 = vmatprep.subr.mxu0 0.0
    %143 = vmatpush1.msra.mxu0 0.0
    %144 = vmatprep.subr.mxu0 0.0
    %145 = vmatpush1.msra.mxu0 0.0
    %146 = vmatprep.subr.mxu0 0.0
    %147 = vmatpush1.msra.mxu0 0.0
    %148 = vmatprep.subr.mxu0 0.0
    %149 = vmatpush1.msra.mxu0 0.0
    %150 = vmatprep.subr.mxu0 0.0
    %151 = vmatpush1.msra.mxu0 0.0
    %152 = vmatprep.subr.mxu0 0.0
    %153 = vmatpush1.msra.mxu0 0.0
    %154 = vmatprep.subr.mxu0 0.0
    %155 = vmatpush1.msra.mxu0 0.0
    %156 = vmatprep.subr.mxu0 0.0
    %157 = vmatpush1.msra.mxu0 0.0
    %158 = vmatprep.subr.mxu0 0.0
    %159 = vmatpush1.msra.mxu0 0.0
    %160 = vmatprep.subr.mxu0 0.0
    %161 = vmatpush1.msra.mxu0 0.0
    %162 = vmatprep.subr.mxu0 0.0
    %163 = vmatpush1.msra.mxu0 0.0
    %164 = vmatprep.subr.mxu0 0.0
    %165 = vmatpush1.msra.mxu0 0.0
    %166 = vmatprep.subr.mxu0 0.0
    %167 = vmatpush1.msra.mxu0 0.0
    %168 = vmatprep.subr.mxu0 0.0
    %169 = vmatpush1.msra.mxu0 0.0
    %170 = vmatprep.subr.mxu0 0.0
    %171 = vmatpush1.msra.mxu0 0.0
    %172 = vmatprep.subr.mxu0 0.0
    %173 = vmatpush1.msra.mxu0 0.0
    %174 = vmatprep.subr.mxu0 0.0
    %175 = vmatpush1.msra.mxu0 0.0
    %176 = vmatprep.subr.mxu0 0.0
    %177 = vmatpush1.msra.mxu0 0.0
    %178 = vmatprep.subr.mxu0 0.0
    %179 = vmatpush1.msra.mxu0 0.0
    %180 = vmatprep.subr.mxu0 0.0
    %181 = vmatpush1.msra.mxu0 0.0
    %182 = vmatprep.subr.mxu0 0.0
    %183 = vmatpush1.msra.mxu0 0.0
    %184 = vmatprep.subr.mxu0 0.0
    %185 = vmatpush1.msra.mxu0 0.0
    %186 = vmatprep.subr.mxu0 0.0
    %187 = vmatpush1.msra.mxu0 0.0
    %188 = vmatprep.subr.mxu0 0.0
    %189 = vmatpush1.msra.mxu0 0.0
    %190 = vmatprep.subr.mxu0 0.0
    %191 = vmatpush1.msra.mxu0 0.0
    %192 = vmatprep.subr.mxu0 0.0
    %193 = vmatpush1.msra.mxu0 0.0
    %194 = vmatprep.mubr.f32.mxu0 0.0
    %195 = vmatmul.mubr.f32.gmra.mrb[0].mxu0 %v124
    %v196 = vpop.f32.mrb[0].mxu0
    %v197 = vadd.f32 %v121, %v196
    %v198 = vpop.f32.mrb[0].mxu0
    %199 = vdwg.mxu0
    %vm200 = vcmask 31744
    %201 = vst.msk [vmem:[#allocation3] sm:$0xff] %vm200, %v197
    // Predicated region
    $region22: #{tpu_custom_call.1} parent=1 // pred_check
      _
    $region23: #{tpu_custom_call.1} parent=1 // pred_check_branch
      %203 = sbr.rel (0) target = $region25
    $region24: #{tpu_custom_call.1} parent=1 // pred_region
      %s205 = ssub.s32 128, 32
      %206 = vsyncadd [#allocation4], %s205
      %s207 = sshll.u32 [#allocation3], 4
      %s208 = int_to_ptr.vmem [resolvable:$true] %s207
      %213 = dma.vmem_to_hbm [thread:$0]  %s208, 32, %s5, [#allocation4], 32, 32, 2
    $region25: #{tpu_custom_call.1} parent=1 // pred_fallthru
      _
    // Predicated region
    $region26: #{tpu_custom_call.1} parent=1 // pred_check
      _
    $region27: #{tpu_custom_call.1} parent=1 // pred_check_branch
      %215 = sbr.rel (0) target = $region29
    $region28: #{tpu_custom_call.1} parent=1 // pred_region
      %216 = dma.done [#allocation4], 128
    $region29: #{tpu_custom_call.1} parent=1 // pred_fallthru
      _
    %217 = vsyncpa [#allocation4], 1

</llo_original>
